<compile_context>
chip_gen: v7x
topology: tpu7x:2x2x1
jax: 0.10.0
libtpu: 0.0.40
codegen_flags: <defaults>
</compile_context>

<pallas_src>
import functools
import math
import numpy as np

import jax
import jax.numpy as jnp
from jax.experimental import pallas as pl
from jax.experimental.pallas import tpu as pltpu

# ---------------- static config (mirrors `class args(Config)`) --------------
DETERMINISTIC = True     # args.DETERMINISTIC
STEREO = False           # args.STEREO
FIDELITY = 0.95          # args.FIDELITY

# Stochastic path (reparametrize randn / noise pad / decoder add_noise) is not
# implemented — fail loudly instead of silently being wrong.
assert DETERMINISTIC, "non-deterministic RAVE path (randn_like / noise pad) not implemented"

# ---------------- synthetic model hyper-parameters ---------------------------
N_BANDS = 16                          # pseudo-PQMF band count
RATIO_ENC = 8                         # encoder temporal downsampling per band
LATENT = 32                           # pretrained.latent_size
CIN = N_BANDS * RATIO_ENC             # = 128 channels at latent rate

# cropped_latent_size exactly as in TraceModel.__init__ (not trained_cropped):
_fidelity_curve = 1.0 - np.exp(-(np.arange(1, LATENT + 1)) / 4.0)   # synthetic fidelity buffer
_ls = int(np.argmax(_fidelity_curve > FIDELITY))
CROPPED = 2 ** math.ceil(math.log2(_ls))                            # -> 16 here

# Band-fold permutation: folded x has xf[row, band*RATIO+r] = x_raw[row, r*N_BANDS+band].
# _INV_PERM[k = r*N_BANDS+band] = band*RATIO_ENC + r  (used to permute W rows/cols so the
# wrapper needs NO transpose — only reshapes).
_INV_PERM = np.arange(CIN).reshape(N_BANDS, RATIO_ENC).T.reshape(-1)


# ================================ kernel =====================================
def _trace_kernel(x_ref, w_ref, b_ref, o_ref):
    # x_ref: (tile_rows, CIN) f32 audio frames, w_ref: (CIN, CIN) bf16 (or f32
    # for the exactness check), b_ref: (1, CIN) f32.  The f32->bf16 downcast is
    # fused into the kernel (in-register, right before the MXU push) so the
    # activations cross HBM exactly once on the way in.  Single MXU matmul,
    # f32 accumulate, f32 bias + tanh epilogue (v5e has no bf16 VPU/EUP).
    x = x_ref[...].astype(w_ref.dtype)
    acc = jnp.dot(x, w_ref[...], preferred_element_type=jnp.float32)
    o_ref[...] = jnp.tanh(acc + b_ref[...]).astype(o_ref.dtype)


# ============================ parameter folding ==============================
def fold_trace_params(params, compute_dtype=jnp.bfloat16):
    """Fold the deterministic TraceModel linear chain into (W_pp, b_pp).

    y = tanh(x_raw @ W_pp + b_pp) with x_raw = x.reshape(B*T, CIN) (no transpose).
    """
    w_enc, b_enc, pca, mu, w_dec, b_dec = params

    # DETERMINISTIC: scale/softplus/std half of the encoder head is dead -> drop it.
    w_enc_m = w_enc[:, :LATENT]
    b_enc_m = b_enc[:, :LATENT]

    # crop + PCA + inverse-PCA  ==  one 32x32 projector (exact zero-masking >= CROPPED)
    pca_c = pca[:CROPPED]                       # (CROPPED, LATENT)
    P = pca_c.T @ pca_c                         # (LATENT, LATENT)

    # z3 = (mean - mu) @ P + mu ; y_pre = z3 @ w_dec + b_dec
    W_eff = w_enc_m @ P @ w_dec                                     # (CIN, CIN)
    b_eff = ((b_enc_m - mu) @ P + mu) @ w_dec + b_dec               # (1, CIN)

    # Fold the PQMF band fold (input) and un-fold (output) permutations into W/b
    # so the wrapper avoids both HBM transpose round trips.
    inv = jnp.asarray(_INV_PERM)
    W_pp = W_eff[inv][:, inv].astype(compute_dtype)                 # MXU operand dtype
    b_pp = b_eff[:, inv].astype(jnp.float32)                        # f32 epilogue bias
    return W_pp, b_pp


# ================================ wrapper ====================================
def _num_tensorcores():
    # v7x has 2 TensorCores per chip; v5e/v6e have 1.
    try:
        kind = jax.devices()[0].device_kind.lower()
        if "v7" in kind:
            return 2
    except Exception:
        pass
    return 1


def _pick_tile_rows(bt, num_cores):
    if num_cores >= 2:
        # v7x: keep >= 4 grid steps of <= 1024 rows so both TCs stream with
        # pipelining and step-overhead amortization.
        cap = min(1024, max(bt // 4, 8))
    else:
        # v5e/v6e (1 TC): take the biggest tile (<= 2048) that divides BT, even
        # if that means a 1-step grid — bigger tiles sit at ~85% of HBM roofline
        # and there is no second core to feed.  2048 rows (f32 in + f32 out,
        # double-buffered) is ~4 MB, far under the 16 MiB scoped-VMEM default.
        cap = min(2048, bt)
    cap = max(cap, 8)
    for t in range(cap, 7, -1):
        if bt % t == 0 and t % 8 == 0:
            return t
    return bt  # full-extent block (legal even if not a multiple of 8)


@functools.partial(jax.jit, static_argnames=("tile_rows", "out_dtype"))
def trace_model_forward(x, w_pp, b_pp, tile_rows=None, out_dtype=jnp.float32):
    """x: (B, 1, L) float32, PyTorch NCL layout. Returns (B, 1, L) out_dtype."""
    B, C, L = x.shape
    assert C == 1 and L % CIN == 0
    T = L // CIN
    BT = B * T
    if tile_rows is None:
        tile_rows = _pick_tile_rows(BT, _num_tensorcores())
    assert BT % tile_rows == 0

    # resample.from/to_target_sampling_rate: identity (target_sr == sr here)
    # TODO(synk): real Resampling uses polyphase sinc filters.
    # pseudo-PQMF analysis/synthesis: polyphase fold, folded into W_pp above.
    # TODO(synk): real PQMF applies the analysis/synthesis filterbank.
    # TODO(synk): real RAVE encoder/decoder are deep conv nets (see header note).
    x_raw = x.reshape(BT, CIN)            # pure reshape; no HBM transpose, NO cast

    in_bytes = x_raw.dtype.itemsize
    out_bytes = jnp.dtype(out_dtype).itemsize
    cost = pl.CostEstimate(
        flops=2 * BT * CIN * CIN,
        transcendentals=BT * CIN,
        bytes_accessed=BT * CIN * (in_bytes + out_bytes)
        + CIN * CIN * w_pp.dtype.itemsize
        + CIN * b_pp.dtype.itemsize,
    )

    grid = (BT // tile_rows,)
    y = pl.pallas_call(
        _trace_kernel,
        out_shape=jax.ShapeDtypeStruct((BT, CIN), out_dtype),
        grid=grid,
        in_specs=[
            pl.BlockSpec((tile_rows, CIN), lambda i: (i, 0)),
            pl.BlockSpec((CIN, CIN), lambda i: (0, 0)),   # resident, not re-DMA'd
            pl.BlockSpec((1, CIN), lambda i: (0, 0)),
        ],
        out_specs=pl.BlockSpec((tile_rows, CIN), lambda i: (i, 0)),
        # TODO(synk): on v7x verify in xprof that both TCs run; if not, switch
        # the row axis to pltpu.CORE_PARALLEL.
        compiler_params=pltpu.CompilerParams(dimension_semantics=("parallel",)),
        cost_estimate=cost,
    )(x_raw, w_pp, b_pp)

    # output un-fold already folded into W_pp/b_pp columns -> pure reshape back.
    return y.reshape(B, 1, L)


# ------------------------ pure-JAX reference (explicit staged path) ----------
def _reference_forward(x, params):
    w_enc, b_enc, pca, mu, w_dec, b_dec = params
    B, _, L = x.shape
    T = L // CIN
    xb = x.reshape(B, L // N_BANDS, N_BANDS).transpose(0, 2, 1)
    xf = xb.reshape(B, N_BANDS, T, RATIO_ENC).transpose(0, 2, 1, 3).reshape(B * T, CIN)
    h = xf @ w_enc + b_enc
    mean = h[:, :LATENT]
    scale = h[:, LATENT:]
    std = jax.nn.softplus(scale) + 1e-4          # computed then unused (deterministic)
    del std
    z = mean - mu
    z = z @ pca.T
    z = jnp.where(jnp.arange(LATENT)[None, :] < CROPPED, z, 0.0)
    z = z @ pca + mu
    y = jnp.tanh(z @ w_dec + b_dec)
    yb = (y.reshape(B, T, N_BANDS, RATIO_ENC)
            .transpose(0, 2, 1, 3)
            .reshape(B, N_BANDS, L // N_BANDS))
    return yb.transpose(0, 2, 1).reshape(B, 1, L)


# =================================== main ====================================
if __name__ == "__main__":
    key = jax.random.PRNGKey(0)
    k1, k2, k3, k4, k5, k6, k7 = jax.random.split(key, 7)

    # deterministic synthetic parameters (shapes implied by the module)
    w_enc = 0.05 * jax.random.normal(k1, (CIN, 2 * LATENT), jnp.float32)
    b_enc = 0.01 * jax.random.normal(k2, (1, 2 * LATENT), jnp.float32)
    pca, _ = jnp.linalg.qr(jax.random.normal(k3, (LATENT, LATENT), jnp.float32))
    pca = pca.astype(jnp.float32)                                  # latent_pca
    mu = 0.1 * jax.random.normal(k4, (1, LATENT), jnp.float32)     # latent_mean
    w_dec = 0.05 * jax.random.normal(k5, (LATENT, CIN), jnp.float32)
    b_dec = 0.01 * jax.random.normal(k6, (1, CIN), jnp.float32)
    params = (w_enc, b_enc, pca, mu, w_dec, b_dec)

    # input audio, NCL like the PyTorch `x = torch.zeros(1, 1, 2**14)` probe
    x = jax.random.normal(k7, (2, 1, 2 ** 14), jnp.float32)        # BT = 256 rows

    ref = jax.block_until_ready(_reference_forward(x, params))

    # 1) f32 weights: proves the constant-folding (P, W_eff, permutations) is exact.
    w32, b32 = fold_trace_params(params, compute_dtype=jnp.float32)
    out32 = jax.block_until_ready(trace_model_forward(x, w32, b32))
    assert out32.shape == (2, 1, 2 ** 14) and out32.dtype == jnp.float32
    assert bool(jnp.allclose(out32, ref, atol=1e-4, rtol=1e-3)), "f32 mismatch vs reference"

    # 2) default perf path: f32 x streamed once, bf16 MXU operands (in-kernel
    #    downcast), f32 accumulate / bias / tanh, f32 output.
    wbf, bbf = fold_trace_params(params, compute_dtype=jnp.bfloat16)
    out = jax.block_until_ready(trace_model_forward(x, wbf, bbf))
    assert out.shape == (2, 1, 2 ** 14) and out.dtype == jnp.float32
    assert bool(jnp.allclose(out, ref, atol=2e-2, rtol=2e-2)), "bf16 mismatch vs reference"

    # 3) optional low-writeback path: bf16 output (tanh output in [-1,1]).
    out_bf = jax.block_until_ready(
        trace_model_forward(x, wbf, bbf, out_dtype=jnp.bfloat16))
    assert out_bf.shape == (2, 1, 2 ** 14) and out_bf.dtype == jnp.bfloat16
    assert bool(jnp.allclose(out_bf.astype(jnp.float32), ref, atol=3e-2, rtol=3e-2)), \
        "bf16-out mismatch vs reference"

    print("KERNEL_OK")
</pallas_src>

<mosaic_0001>
module attributes {stable_mosaic.version = 11 : i64} {
  func.func @_trace_kernel(%arg0: i32, %arg1: memref<256x128xf32, #tpu.memory_space<vmem>>, %arg2: memref<128x128xf32, #tpu.memory_space<vmem>>, %arg3: memref<1x128xf32, #tpu.memory_space<vmem>>, %arg4: memref<256x128xf32, #tpu.memory_space<vmem>>) attributes {dimension_semantics = [#tpu.dimension_semantics<parallel>], iteration_bounds = array<i64: 1>, scalar_prefetch = 0 : i64, scratch_operands = 0 : i64, tpu.core_type = #tpu.core_type<tc>, window_params = [{transform_indices = @transform_0, window_bounds = array<i64: 256, 128>}, {pipeline_mode = #tpu.pipeline_mode<synchronous>, transform_indices = @transform_1, window_bounds = array<i64: 128, 128>}, {pipeline_mode = #tpu.pipeline_mode<synchronous>, transform_indices = @transform_2, window_bounds = array<i64: 1, 128>}, {transform_indices = @transform_3, window_bounds = array<i64: 256, 128>}]} {
    %c0 = arith.constant 0 : index
    %c0_0 = arith.constant 0 : index
    %0 = vector.load %arg1[%c0, %c0_0] : memref<256x128xf32, #tpu.memory_space<vmem>>, vector<256x128xf32>
    %c0_1 = arith.constant 0 : index
    %c0_2 = arith.constant 0 : index
    %1 = vector.load %arg2[%c0_1, %c0_2] : memref<128x128xf32, #tpu.memory_space<vmem>>, vector<128x128xf32>
    %cst = arith.constant dense<0.000000e+00> : vector<256x128xf32>
    %2 = tpu.matmul %0, %1, %cst {dimension_numbers = #tpu.dot_dimension_numbers<[1], [0], [0], [1], [0, 0, 1, 1], [], []>} : vector<256x128xf32>, vector<128x128xf32>, vector<256x128xf32> -> vector<256x128xf32>
    %c0_3 = arith.constant 0 : index
    %c0_4 = arith.constant 0 : index
    %3 = vector.load %arg3[%c0_3, %c0_4] : memref<1x128xf32, #tpu.memory_space<vmem>>, vector<1x128xf32>
    %4 = vector.broadcast %3 : vector<1x128xf32> to vector<256x128xf32>
    %5 = arith.addf %2, %4 : vector<256x128xf32>
    %6 = math.tanh %5 : vector<256x128xf32>
    %c0_5 = arith.constant 0 : index
    %c0_6 = arith.constant 0 : index
    %7 = vector.load %arg4[%c0_5, %c0_6] : memref<256x128xf32, #tpu.memory_space<vmem>>, vector<256x128xf32>
    tpu.vector_store %arg4[%c0_5, %c0_6], %6 {strides = array<i32>} : memref<256x128xf32, #tpu.memory_space<vmem>>, vector<256x128xf32>,
    return
  }
  func.func @transform_0(%arg0: i32) -> (i32, i32) {
    %c0_i32 = arith.constant 0 : i32
    %c0_i32_0 = arith.constant 0 : i32
    return %arg0, %c0_i32 : i32, i32
  }
  func.func @transform_1(%arg0: i32) -> (i32, i32) {
    %c0_i32 = arith.constant 0 : i32
    %c0_i32_0 = arith.constant 0 : i32
    %c0_i32_1 = arith.constant 0 : i32
    return %c0_i32, %c0_i32_0 : i32, i32
  }
  func.func @transform_2(%arg0: i32) -> (i32, i32) {
    %c0_i32 = arith.constant 0 : i32
    %c0_i32_0 = arith.constant 0 : i32
    %c0_i32_1 = arith.constant 0 : i32
    return %c0_i32, %c0_i32_0 : i32, i32
  }
  func.func @transform_3(%arg0: i32) -> (i32, i32) {
    %c0_i32 = arith.constant 0 : i32
    %c0_i32_0 = arith.constant 0 : i32
    return %arg0, %c0_i32 : i32, i32
  }
}

</mosaic_0001>

<llo_original>
// kernel: trace_model_forward.1
$region0: #{trace_model_forward.1}
  #allocation0 [shape = 'u32[]', space=smem, size = 0x4, offset = 0x4, fixed_abs, tag = 'smem constant byte address 0x4 - core index']
  #allocation1 [shape = 'u32[144,128]{1,0:T(1,128)}', space=vmem, size = 0x12000, scoped, tag = 'internal scratch']
  %s0 = inlined_call_operand.hbm [shape: f32[256,128], index: 0, kind: input, shape index: {}]
  %s1 = inlined_call_operand.hbm [shape: f32[128,128], index: 1, kind: input, shape index: {}]
  %s2 = inlined_call_operand.vmem [shape: f32[1,128], index: 2, kind: input, shape index: {}]
  %s3 = inlined_call_operand.hbm [shape: f32[256,128], index: 3, kind: output, shape index: {}]
  %s4 = sld [smem:[#allocation0]]
  $region30: #{trace_model_forward.1} parent=0
    _
  %s6 = ssub.s32 1, %s4
  %s7 = scalar_select 0, %s6, %s4
  $region1: #{trace_model_forward.1} parent=0
    #allocation2 [shape = 'u8[131072]{0}', space=vmem, size = 0x20000, scoped, tag = 'input window, operand 0, single buffered']
    #allocation3 [shape = 's32[1]{0}', space=sflag, size = 0x4, scoped, tag = 'scoped memory for trace_model_forward.1']
    #allocation4 [shape = 's32[1]{0}', space=sflag, size = 0x4, scoped, tag = 'scoped memory for trace_model_forward.1']
    #allocation5 [shape = 'u8[65536]{0}', space=vmem, size = 0x10000, scoped, tag = 'input window, operand 1, single buffered']
    #allocation6 [shape = 's32[1]{0}', space=sflag, size = 0x4, scoped, tag = 'scoped memory for trace_model_forward.1']
    #allocation7 [shape = 'u8[131072]{0}', space=vmem, size = 0x20000, scoped, tag = 'output window, operand 0, single buffered']
    %8 = vsyncpa [#allocation3], 0
    %9 = vsyncpa [#allocation6], 0
    %10 = vsyncpa [#allocation4], 0
    // Predicated region
    $region2: #{trace_model_forward.1} parent=1 // pred_check
      _
    $region3: #{trace_model_forward.1} parent=1 // pred_check_branch
      %12 = sbr.rel (0) target = $region5
    $region4: #{trace_model_forward.1} parent=1 // pred_region
      %s14 = ssub.s32 4096, 4096
      %15 = vsyncadd [#allocation3], %s14
      %s16 = sshll.u32 [#allocation2], 4
      %s17 = int_to_ptr.vmem [resolvable:$true] %s16
      %22 = dma.hbm_to_vmem [thread:$0]  %s0, 4096, %s17, [#allocation3], 128, 128, 8
    $region5: #{trace_model_forward.1} parent=1 // pred_fallthru
      _
    // Predicated region
    $region6: #{trace_model_forward.1} parent=1 // pred_check
      _
    $region7: #{trace_model_forward.1} parent=1 // pred_check_branch
      %24 = sbr.rel (0) target = $region9
    $region8: #{trace_model_forward.1} parent=1 // pred_region
      %s26 = ssub.s32 2048, 2048
      %27 = vsyncadd [#allocation6], %s26
      %s28 = sshll.u32 [#allocation5], 4
      %s29 = int_to_ptr.vmem [resolvable:$true] %s28
      %34 = dma.hbm_to_vmem [thread:$0]  %s1, 2048, %s29, [#allocation6], 128, 128, 8
    $region9: #{trace_model_forward.1} parent=1 // pred_fallthru
      _
    // Predicated region
    $region10: #{trace_model_forward.1} parent=1 // pred_check
      _
    $region11: #{trace_model_forward.1} parent=1 // pred_check_branch
      %36 = sbr.rel (0) target = $region13
    $region12: #{trace_model_forward.1} parent=1 // pred_region
      _
    $region13: #{trace_model_forward.1} parent=1 // pred_fallthru
      _
    // Predicated region
    $region14: #{trace_model_forward.1} parent=1 // pred_check
      _
    $region15: #{trace_model_forward.1} parent=1 // pred_check_branch
      %38 = sbr.rel (0) target = $region17
    $region16: #{trace_model_forward.1} parent=1 // pred_region
      %39 = dma.done [#allocation3], 4096
    $region17: #{trace_model_forward.1} parent=1 // pred_fallthru
      _
    // Predicated region
    $region18: #{trace_model_forward.1} parent=1 // pred_check
      _
    $region19: #{trace_model_forward.1} parent=1 // pred_check_branch
      %41 = sbr.rel (0) target = $region21
    $region20: #{trace_model_forward.1} parent=1 // pred_region
      %42 = dma.done [#allocation6], 2048
    $region21: #{trace_model_forward.1} parent=1 // pred_fallthru
      _
    %v43 = vld [vmem:[#allocation2] sm:$0xff]
    %v44 = vld [vmem:[#allocation2 + $0x8] sm:$0xff]
    %v45 = vld [vmem:[#allocation2 + $0x10] sm:$0xff]
    %v46 = vld [vmem:[#allocation2 + $0x18] sm:$0xff]
    %v47 = vld [vmem:[#allocation2 + $0x20] sm:$0xff]
    %v48 = vld [vmem:[#allocation2 + $0x28] sm:$0xff]
    %v49 = vld [vmem:[#allocation2 + $0x30] sm:$0xff]
    %v50 = vld [vmem:[#allocation2 + $0x38] sm:$0xff]
    %v51 = vld [vmem:[#allocation2 + $0x40] sm:$0xff]
    %v52 = vld [vmem:[#allocation2 + $0x48] sm:$0xff]
    %v53 = vld [vmem:[#allocation2 + $0x50] sm:$0xff]
    %v54 = vld [vmem:[#allocation2 + $0x58] sm:$0xff]
    %v55 = vld [vmem:[#allocation2 + $0x60] sm:$0xff]
    %v56 = vld [vmem:[#allocation2 + $0x68] sm:$0xff]
    %v57 = vld [vmem:[#allocation2 + $0x70] sm:$0xff]
    %v58 = vld [vmem:[#allocation2 + $0x78] sm:$0xff]
    %v59 = vld [vmem:[#allocation2 + $0x80] sm:$0xff]
    %v60 = vld [vmem:[#allocation2 + $0x88] sm:$0xff]
    %v61 = vld [vmem:[#allocation2 + $0x90] sm:$0xff]
    %v62 = vld [vmem:[#allocation2 + $0x98] sm:$0xff]
    %v63 = vld [vmem:[#allocation2 + $0xa0] sm:$0xff]
    %v64 = vld [vmem:[#allocation2 + $0xa8] sm:$0xff]
    %v65 = vld [vmem:[#allocation2 + $0xb0] sm:$0xff]
    %v66 = vld [vmem:[#allocation2 + $0xb8] sm:$0xff]
    %v67 = vld [vmem:[#allocation2 + $0xc0] sm:$0xff]
    %v68 = vld [vmem:[#allocation2 + $0xc8] sm:$0xff]
    %v69 = vld [vmem:[#allocation2 + $0xd0] sm:$0xff]
    %v70 = vld [vmem:[#allocation2 + $0xd8] sm:$0xff]
    %v71 = vld [vmem:[#allocation2 + $0xe0] sm:$0xff]
    %v72 = vld [vmem:[#allocation2 + $0xe8] sm:$0xff]
    %v73 = vld [vmem:[#allocation2 + $0xf0] sm:$0xff]
    %v74 = vld [vmem:[#allocation2 + $0xf8] sm:$0xff]
    %v75 = vld [vmem:[#allocation5] sm:$0xff]
    %v76 = vld [vmem:[#allocation5 + $0x8] sm:$0xff]
    %v77 = vld [vmem:[#allocation5 + $0x10] sm:$0xff]
    %v78 = vld [vmem:[#allocation5 + $0x18] sm:$0xff]
    %v79 = vld [vmem:[#allocation5 + $0x20] sm:$0xff]
    %v80 = vld [vmem:[#allocation5 + $0x28] sm:$0xff]
    %v81 = vld [vmem:[#allocation5 + $0x30] sm:$0xff]
    %v82 = vld [vmem:[#allocation5 + $0x38] sm:$0xff]
    %v83 = vld [vmem:[#allocation5 + $0x40] sm:$0xff]
    %v84 = vld [vmem:[#allocation5 + $0x48] sm:$0xff]
    %v85 = vld [vmem:[#allocation5 + $0x50] sm:$0xff]
    %v86 = vld [vmem:[#allocation5 + $0x58] sm:$0xff]
    %v87 = vld [vmem:[#allocation5 + $0x60] sm:$0xff]
    %v88 = vld [vmem:[#allocation5 + $0x68] sm:$0xff]
    %v89 = vld [vmem:[#allocation5 + $0x70] sm:$0xff]
    %v90 = vld [vmem:[#allocation5 + $0x78] sm:$0xff]
    %v91 = vld [vmem:[%s2] sm:$0x1]
    %v93 = vlaneseq
    %v94 = vshrl.u32 %v93, 7
    %v95 = vsub.s32 0, %v94
    %v96 = vrot.slane %v91, %v95
    %98 = vmatprep.subr.mxu0 0.0
    %99 = vmatpush1.msra.mxu0 %v75
    %100 = vmatprep.subr.mxu0 0.0
    %101 = vmatpush1.msra.mxu0 %v76
    %102 = vmatprep.subr.mxu0 0.0
    %103 = vmatpush1.msra.mxu0 %v77
    %104 = vmatprep.subr.mxu0 0.0
    %105 = vmatpush1.msra.mxu0 %v78
    %106 = vmatprep.subr.mxu0 0.0
    %107 = vmatpush1.msra.mxu0 %v79
    %108 = vmatprep.subr.mxu0 0.0
    %109 = vmatpush1.msra.mxu0 %v80
    %110 = vmatprep.subr.mxu0 0.0
    %111 = vmatpush1.msra.mxu0 %v81
    %112 = vmatprep.subr.mxu0 0.0
    %113 = vmatpush1.msra.mxu0 %v82
    %114 = vmatprep.subr.mxu0 0.0
    %115 = vmatpush1.msra.mxu0 %v83
    %116 = vmatprep.subr.mxu0 0.0
    %117 = vmatpush1.msra.mxu0 %v84
    %118 = vmatprep.subr.mxu0 0.0
    %119 = vmatpush1.msra.mxu0 %v85
    %120 = vmatprep.subr.mxu0 0.0
    %121 = vmatpush1.msra.mxu0 %v86
    %122 = vmatprep.subr.mxu0 0.0
    %123 = vmatpush1.msra.mxu0 %v87
    %124 = vmatprep.subr.mxu0 0.0
    %125 = vmatpush1.msra.mxu0 %v88
    %126 = vmatprep.subr.mxu0 0.0
    %127 = vmatpush1.msra.mxu0 %v89
    %128 = vmatprep.subr.mxu0 0.0
    %129 = vmatpush1.msra.mxu0 %v90
    %130 = vmatprep.subr.mxu0 0.0
    %131 = vmatpush1.msra.mxu0 0.0
    %132 = vmatprep.subr.mxu0 0.0
    %133 = vmatpush1.msra.mxu0 0.0
    %134 = vmatprep.subr.mxu0 0.0
    %135 = vmatpush1.msra.mxu0 0.0
    %136 = vmatprep.subr.mxu0 0.0
    %137 = vmatpush1.msra.mxu0 0.0
    %138 = vmatprep.subr.mxu0 0.0
    %139 = vmatpush1.msra.mxu0 0.0
    %140 = vmatprep.subr.mxu0 0.0
    %141 = vmatpush1.msra.mxu0 0.0
    %142 = vmatprep.subr.mxu0 0.0
    %143 = vmatpush1.msra.mxu0 0.0
    %144 = vmatprep.subr.mxu0 0.0
    %145 = vmatpush1.msra.mxu0 0.0
    %146 = vmatprep.subr.mxu0 0.0
    %147 = vmatpush1.msra.mxu0 0.0
    %148 = vmatprep.subr.mxu0 0.0
    %149 = vmatpush1.msra.mxu0 0.0
    %150 = vmatprep.subr.mxu0 0.0
    %151 = vmatpush1.msra.mxu0 0.0
    %152 = vmatprep.subr.mxu0 0.0
    %153 = vmatpush1.msra.mxu0 0.0
    %154 = vmatprep.subr.mxu0 0.0
    %155 = vmatpush1.msra.mxu0 0.0
    %156 = vmatprep.subr.mxu0 0.0
    %157 = vmatpush1.msra.mxu0 0.0
    %158 = vmatprep.subr.mxu0 0.0
    %159 = vmatpush1.msra.mxu0 0.0
    %160 = vmatprep.subr.mxu0 0.0
    %161 = vmatpush1.msra.mxu0 0.0
    %162 = vmatprep.mubr.f32.mxu0 0.0
    %163 = vmatmul.mubr.f32.gmra.mrb[0].mxu0 %v43
    %v164 = vpop.f32.mrb[0].mxu0
    %v165 = vadd.f32 %v96, %v164
    %v166 = vpop.f32.mrb[0].mxu0
    %167 = vmatprep.mubr.f32.mxu0 0.0
    %168 = vmatmul.mubr.f32.gmra.mrb[0].mxu0 %v44
    %v169 = vpop.f32.mrb[0].mxu0
    %v170 = vadd.f32 %v96, %v169
    %v171 = vpop.f32.mrb[0].mxu0
    %172 = vmatprep.mubr.f32.mxu0 0.0
    %173 = vmatmul.mubr.f32.gmra.mrb[0].mxu0 %v45
    %v174 = vpop.f32.mrb[0].mxu0
    %v175 = vadd.f32 %v96, %v174
    %v176 = vpop.f32.mrb[0].mxu0
    %177 = vmatprep.mubr.f32.mxu0 0.0
    %178 = vmatmul.mubr.f32.gmra.mrb[0].mxu0 %v46
    %v179 = vpop.f32.mrb[0].mxu0
    %v180 = vadd.f32 %v96, %v179
    %v181 = vpop.f32.mrb[0].mxu0
    %182 = vmatprep.mubr.f32.mxu0 0.0
    %183 = vmatmul.mubr.f32.gmra.mrb[0].mxu0 %v47
    %v184 = vpop.f32.mrb[0].mxu0
    %v185 = vadd.f32 %v96, %v184
    %v186 = vpop.f32.mrb[0].mxu0
    %187 = vmatprep.mubr.f32.mxu0 0.0
    %188 = vmatmul.mubr.f32.gmra.mrb[0].mxu0 %v48
    %v189 = vpop.f32.mrb[0].mxu0
    %v190 = vadd.f32 %v96, %v189
    %v191 = vpop.f32.mrb[0].mxu0
    %192 = vmatprep.mubr.f32.mxu0 0.0
    %193 = vmatmul.mubr.f32.gmra.mrb[0].mxu0 %v49
    %v194 = vpop.f32.mrb[0].mxu0
    %v195 = vadd.f32 %v96, %v194
    %v196 = vpop.f32.mrb[0].mxu0
    %197 = vmatprep.mubr.f32.mxu0 0.0
    %198 = vmatmul.mubr.f32.gmra.mrb[0].mxu0 %v50
    %v199 = vpop.f32.mrb[0].mxu0
    %v200 = vadd.f32 %v96, %v199
    %v201 = vpop.f32.mrb[0].mxu0
    %202 = vmatprep.mubr.f32.mxu0 0.0
    %203 = vmatmul.mubr.f32.gmra.mrb[0].mxu0 %v51
    %v204 = vpop.f32.mrb[0].mxu0
    %v205 = vadd.f32 %v96, %v204
    %v206 = vpop.f32.mrb[0].mxu0
    %207 = vmatprep.mubr.f32.mxu0 0.0
    %208 = vmatmul.mubr.f32.gmra.mrb[0].mxu0 %v52
    %v209 = vpop.f32.mrb[0].mxu0
    %v210 = vadd.f32 %v96, %v209
    %v211 = vpop.f32.mrb[0].mxu0
    %212 = vmatprep.mubr.f32.mxu0 0.0
    %213 = vmatmul.mubr.f32.gmra.mrb[0].mxu0 %v53
    %v214 = vpop.f32.mrb[0].mxu0
    %v215 = vadd.f32 %v96, %v214
    %v216 = vpop.f32.mrb[0].mxu0
    %217 = vmatprep.mubr.f32.mxu0 0.0
    %218 = vmatmul.mubr.f32.gmra.mrb[0].mxu0 %v54
    %v219 = vpop.f32.mrb[0].mxu0
    %v220 = vadd.f32 %v96, %v219
    %v221 = vpop.f32.mrb[0].mxu0
    %222 = vmatprep.mubr.f32.mxu0 0.0
    %223 = vmatmul.mubr.f32.gmra.mrb[0].mxu0 %v55
    %v224 = vpop.f32.mrb[0].mxu0
    %v225 = vadd.f32 %v96, %v224
    %v226 = vpop.f32.mrb[0].mxu0
    %227 = vmatprep.mubr.f32.mxu0 0.0
    %228 = vmatmul.mubr.f32.gmra.mrb[0].mxu0 %v56
    %v229 = vpop.f32.mrb[0].mxu0
    %v230 = vadd.f32 %v96, %v229
    %v231 = vpop.f32.mrb[0].mxu0
    %232 = vmatprep.mubr.f32.mxu0 0.0
    %233 = vmatmul.mubr.f32.gmra.mrb[0].mxu0 %v57
    %v234 = vpop.f32.mrb[0].mxu0
    %v235 = vadd.f32 %v96, %v234
    %v236 = vpop.f32.mrb[0].mxu0
    %237 = vmatprep.mubr.f32.mxu0 0.0
    %238 = vmatmul.mubr.f32.gmra.mrb[0].mxu0 %v58
    %v239 = vpop.f32.mrb[0].mxu0
    %v240 = vadd.f32 %v96, %v239
    %v241 = vpop.f32.mrb[0].mxu0
    %242 = vmatprep.mubr.f32.mxu0 0.0
    %243 = vmatmul.mubr.f32.gmra.mrb[0].mxu0 %v59
    %v244 = vpop.f32.mrb[0].mxu0
    %v245 = vadd.f32 %v96, %v244
    %v246 = vpop.f32.mrb[0].mxu0
    %247 = vmatprep.mubr.f32.mxu0 0.0
    %248 = vmatmul.mubr.f32.gmra.mrb[0].mxu0 %v60
    %v249 = vpop.f32.mrb[0].mxu0
    %v250 = vadd.f32 %v96, %v249
    %v251 = vpop.f32.mrb[0].mxu0
    %252 = vmatprep.mubr.f32.mxu0 0.0
    %253 = vmatmul.mubr.f32.gmra.mrb[0].mxu0 %v61
    %v254 = vpop.f32.mrb[0].mxu0
    %v255 = vadd.f32 %v96, %v254
    %v256 = vpop.f32.mrb[0].mxu0
    %257 = vmatprep.mubr.f32.mxu0 0.0
    %258 = vmatmul.mubr.f32.gmra.mrb[0].mxu0 %v62
    %v259 = vpop.f32.mrb[0].mxu0
    %v260 = vadd.f32 %v96, %v259
    %v261 = vpop.f32.mrb[0].mxu0
    %262 = vmatprep.mubr.f32.mxu0 0.0
    %263 = vmatmul.mubr.f32.gmra.mrb[0].mxu0 %v63
    %v264 = vpop.f32.mrb[0].mxu0
    %v265 = vadd.f32 %v96, %v264
    %v266 = vpop.f32.mrb[0].mxu0
    %267 = vmatprep.mubr.f32.mxu0 0.0
    %268 = vmatmul.mubr.f32.gmra.mrb[0].mxu0 %v64
    %v269 = vpop.f32.mrb[0].mxu0
    %v270 = vadd.f32 %v96, %v269
    %v271 = vpop.f32.mrb[0].mxu0
    %272 = vmatprep.mubr.f32.mxu0 0.0
    %273 = vmatmul.mubr.f32.gmra.mrb[0].mxu0 %v65
    %v274 = vpop.f32.mrb[0].mxu0
    %v275 = vadd.f32 %v96, %v274
    %v276 = vpop.f32.mrb[0].mxu0
    %277 = vmatprep.mubr.f32.mxu0 0.0
    %278 = vmatmul.mubr.f32.gmra.mrb[0].mxu0 %v66
    %v279 = vpop.f32.mrb[0].mxu0
    %v280 = vadd.f32 %v96, %v279
    %v281 = vpop.f32.mrb[0].mxu0
    %282 = vmatprep.mubr.f32.mxu0 0.0
    %283 = vmatmul.mubr.f32.gmra.mrb[0].mxu0 %v67
    %v284 = vpop.f32.mrb[0].mxu0
    %v285 = vadd.f32 %v96, %v284
    %v286 = vpop.f32.mrb[0].mxu0
    %287 = vmatprep.mubr.f32.mxu0 0.0
    %288 = vmatmul.mubr.f32.gmra.mrb[0].mxu0 %v68
    %v289 = vpop.f32.mrb[0].mxu0
    %v290 = vadd.f32 %v96, %v289
    %v291 = vpop.f32.mrb[0].mxu0
    %292 = vmatprep.mubr.f32.mxu0 0.0
    %293 = vmatmul.mubr.f32.gmra.mrb[0].mxu0 %v69
    %v294 = vpop.f32.mrb[0].mxu0
    %v295 = vadd.f32 %v96, %v294
    %v296 = vpop.f32.mrb[0].mxu0
    %297 = vmatprep.mubr.f32.mxu0 0.0
    %298 = vmatmul.mubr.f32.gmra.mrb[0].mxu0 %v70
    %v299 = vpop.f32.mrb[0].mxu0
    %v300 = vadd.f32 %v96, %v299
    %v301 = vpop.f32.mrb[0].mxu0
    %302 = vmatprep.mubr.f32.mxu0 0.0
    %303 = vmatmul.mubr.f32.gmra.mrb[0].mxu0 %v71
    %v304 = vpop.f32.mrb[0].mxu0
    %v305 = vadd.f32 %v96, %v304
    %v306 = vpop.f32.mrb[0].mxu0
    %307 = vmatprep.mubr.f32.mxu0 0.0
    %308 = vmatmul.mubr.f32.gmra.mrb[0].mxu0 %v72
    %v309 = vpop.f32.mrb[0].mxu0
    %v310 = vadd.f32 %v96, %v309
    %v311 = vpop.f32.mrb[0].mxu0
    %312 = vmatprep.mubr.f32.mxu0 0.0
    %313 = vmatmul.mubr.f32.gmra.mrb[0].mxu0 %v73
    %v314 = vpop.f32.mrb[0].mxu0
    %v315 = vadd.f32 %v96, %v314
    %v316 = vpop.f32.mrb[0].mxu0
    %317 = vmatprep.mubr.f32.mxu0 0.0
    %318 = vmatmul.mubr.f32.gmra.mrb[0].mxu0 %v74
    %v319 = vpop.f32.mrb[0].mxu0
    %v320 = vadd.f32 %v96, %v319
    %v321 = vpop.f32.mrb[0].mxu0
    %322 = vdwg.mxu0
    %v323 = vtanh.pop %v165
    %v324 = vtanh.pop %v170
    %v325 = vtanh.pop %v175
    %v326 = vtanh.pop %v180
    %v327 = vtanh.pop %v185
    %v328 = vtanh.pop %v190
    %v329 = vtanh.pop %v195
    %v330 = vtanh.pop %v200
    %v331 = vtanh.pop %v205
    %v332 = vtanh.pop %v210
    %v333 = vtanh.pop %v215
    %v334 = vtanh.pop %v220
    %v335 = vtanh.pop %v225
    %v336 = vtanh.pop %v230
    %v337 = vtanh.pop %v235
    %v338 = vtanh.pop %v240
    %v339 = vtanh.pop %v245
    %v340 = vtanh.pop %v250
    %v341 = vtanh.pop %v255
    %v342 = vtanh.pop %v260
    %v343 = vtanh.pop %v265
    %v344 = vtanh.pop %v270
    %v345 = vtanh.pop %v275
    %v346 = vtanh.pop %v280
    %v347 = vtanh.pop %v285
    %v348 = vtanh.pop %v290
    %v349 = vtanh.pop %v295
    %v350 = vtanh.pop %v300
    %v351 = vtanh.pop %v305
    %v352 = vtanh.pop %v310
    %v353 = vtanh.pop %v315
    %v354 = vtanh.pop %v320
    %355 = vst [vmem:[#allocation7] sm:$0xff] %v323
    %356 = vst [vmem:[#allocation7 + $0x8] sm:$0xff] %v324
    %357 = vst [vmem:[#allocation7 + $0x10] sm:$0xff] %v325
    %358 = vst [vmem:[#allocation7 + $0x18] sm:$0xff] %v326
    %359 = vst [vmem:[#allocation7 + $0x20] sm:$0xff] %v327
    %360 = vst [vmem:[#allocation7 + $0x28] sm:$0xff] %v328
    %361 = vst [vmem:[#allocation7 + $0x30] sm:$0xff] %v329
    %362 = vst [vmem:[#allocation7 + $0x38] sm:$0xff] %v330
    %363 = vst [vmem:[#allocation7 + $0x40] sm:$0xff] %v331
    %364 = vst [vmem:[#allocation7 + $0x48] sm:$0xff] %v332
    %365 = vst [vmem:[#allocation7 + $0x50] sm:$0xff] %v333
    %366 = vst [vmem:[#allocation7 + $0x58] sm:$0xff] %v334
    %367 = vst [vmem:[#allocation7 + $0x60] sm:$0xff] %v335
    %368 = vst [vmem:[#allocation7 + $0x68] sm:$0xff] %v336
    %369 = vst [vmem:[#allocation7 + $0x70] sm:$0xff] %v337
    %370 = vst [vmem:[#allocation7 + $0x78] sm:$0xff] %v338
    %371 = vst [vmem:[#allocation7 + $0x80] sm:$0xff] %v339
    %372 = vst [vmem:[#allocation7 + $0x88] sm:$0xff] %v340
    %373 = vst [vmem:[#allocation7 + $0x90] sm:$0xff] %v341
    %374 = vst [vmem:[#allocation7 + $0x98] sm:$0xff] %v342
    %375 = vst [vmem:[#allocation7 + $0xa0] sm:$0xff] %v343
    %376 = vst [vmem:[#allocation7 + $0xa8] sm:$0xff] %v344
    %377 = vst [vmem:[#allocation7 + $0xb0] sm:$0xff] %v345
    %378 = vst [vmem:[#allocation7 + $0xb8] sm:$0xff] %v346
    %379 = vst [vmem:[#allocation7 + $0xc0] sm:$0xff] %v347
    %380 = vst [vmem:[#allocation7 + $0xc8] sm:$0xff] %v348
    %381 = vst [vmem:[#allocation7 + $0xd0] sm:$0xff] %v349
    %382 = vst [vmem:[#allocation7 + $0xd8] sm:$0xff] %v350
    %383 = vst [vmem:[#allocation7 + $0xe0] sm:$0xff] %v351
    %384 = vst [vmem:[#allocation7 + $0xe8] sm:$0xff] %v352
    %385 = vst [vmem:[#allocation7 + $0xf0] sm:$0xff] %v353
    %386 = vst [vmem:[#allocation7 + $0xf8] sm:$0xff] %v354
    // Predicated region
    $region22: #{trace_model_forward.1} parent=1 // pred_check
      _
    $region23: #{trace_model_forward.1} parent=1 // pred_check_branch
      %388 = sbr.rel (0) target = $region25
    $region24: #{trace_model_forward.1} parent=1 // pred_region
      %s390 = ssub.s32 4096, 4096
      %391 = vsyncadd [#allocation4], %s390
      %s392 = sshll.u32 [#allocation7], 4
      %s393 = int_to_ptr.vmem [resolvable:$true] %s392
      %398 = dma.vmem_to_hbm [thread:$0]  %s393, 4096, %s3, [#allocation4], 128, 128, 8
    $region25: #{trace_model_forward.1} parent=1 // pred_fallthru
      _
    // Predicated region
    $region26: #{trace_model_forward.1} parent=1 // pred_check
      _
    $region27: #{trace_model_forward.1} parent=1 // pred_check_branch
      %400 = sbr.rel (0) target = $region29
    $region28: #{trace_model_forward.1} parent=1 // pred_region
      %401 = dma.done [#allocation4], 4096
    $region29: #{trace_model_forward.1} parent=1 // pred_fallthru
      _
    %402 = vsyncpa [#allocation3], 1
    %403 = vsyncpa [#allocation6], 1
    %404 = vsyncpa [#allocation4], 1

</llo_original>
